<compile_context>
chip_gen: v7x
topology: tpu7x:2x2x1
jax: 0.10.0
libtpu: 0.0.40
codegen_flags: <defaults>
</compile_context>

<pallas_src>
import jax
import jax.numpy as jnp
from jax.experimental import pallas as pl
from jax.experimental.pallas import tpu as pltpu

_EPS = 1e-10


def _l2norm_kernel(w_ref, x_ref, o_ref):
    # w_ref: (1, C, 1, 128) [dense 4D path] or (1, C, 1) [ragged 3D path]
    # x_ref / o_ref: (1, C, S, 128) or (1, C, BLK) tile
    x = x_ref[...]
    sq = jnp.sum(x * x, axis=1, keepdims=True)
    # Fused rsqrt on the EUP (one op instead of sqrt + full-precision divide).
    # Using eps^2 inside the rsqrt instead of eps outside the sqrt differs
    # from the reference formula only by O(eps) for non-degenerate inputs.
    inv = jax.lax.rsqrt(sq + _EPS * _EPS)
    o_ref[...] = x * inv * w_ref[...]


def _vmem_budget():
    """(block_bytes, vmem_limit_bytes) derived from the chip's VMEM size."""
    try:
        cap = int(pltpu.get_tpu_info().vmem_capacity_bytes)
    except Exception:
        cap = 64 * 1024 * 1024  # conservative default (v7x per-TC VMEM)
    vmem_limit = min(int(cap * 0.7), 64 * 1024 * 1024)
    # in + out, double-buffered => ~4x block resident; keep ~20% slack.
    block_bytes = min(8 * 1024 * 1024, vmem_limit // 5)
    return block_bytes, vmem_limit


def _choose_rows(R, C, N, block_bytes):
    """Pick the spatial block size S in units of 128-lane rows.

    - S is a multiple of 8, or the full extent R (both keep (S, 128) blocks
      sublane/lane dense and legal).
    - C * S * 128 * 4 bytes <= block_bytes (best effort, floor of 8 rows).
    - No exact-divisor requirement: the grid uses cdiv with a partial tail.
    - If the batch axis alone can't feed both v7x TensorCores (odd N), prefer
      an even number of spatial blocks.
    """
    bytes_per_row = C * 128 * 4
    max_rows = max(8, (block_bytes // bytes_per_row // 8) * 8)
    S = R if R <= max_rows else max_rows
    nblk = pl.cdiv(R, S)
    if N % 2 == 1 and (N * nblk) % 2 == 1 and R >= 16:
        s_new = ((pl.cdiv(R, nblk + 1) + 7) // 8) * 8  # aim for even block count
        if s_new >= 8:
            S = s_new
    return S


def l2norm(x, weight):
    """x: (N, C, H, W) f32, weight: (C,) f32 -> x / (||x||_c + eps) * weight."""
    N, C, H, W = x.shape
    HW = H * W
    block_bytes, vmem_limit = _vmem_budget()
    R = pl.cdiv(HW, 128)          # number of 128-lane spatial groups
    S = _choose_rows(R, C, N, block_bytes)

    cparams = pltpu.CompilerParams(
        dimension_semantics=("parallel", "parallel"),
        vmem_limit_bytes=int(vmem_limit),
    )

    if HW % 128 == 0:
        # Dense path: free reshape to (N, C, R, 128); lane-dense (S, 128) blocks.
        x4 = x.reshape(N, C, R, 128)
        # Pre-broadcast weight across lanes once (tiny, resident across grid).
        w4 = jnp.broadcast_to(weight.reshape(1, C, 1, 1), (1, C, 1, 128))
        out = pl.pallas_call(
            _l2norm_kernel,
            out_shape=jax.ShapeDtypeStruct((N, C, R, 128), x.dtype),
            grid_spec=pltpu.PrefetchScalarGridSpec(
                num_scalar_prefetch=0,
                grid=(N, pl.cdiv(R, S)),
                in_specs=[
                    pl.BlockSpec((1, C, 1, 128), lambda n, s: (0, 0, 0, 0)),
                    pl.BlockSpec((1, C, S, 128), lambda n, s: (n, 0, s, 0)),
                ],
                out_specs=pl.BlockSpec((1, C, S, 128), lambda n, s: (n, 0, s, 0)),
            ),
            compiler_params=cparams,
        )(w4, x4)
        return out.reshape(N, C, H, W)

    # Ragged path: unpadded (N, C, HW) view, partial last block on the lane
    # axis (no jnp.pad / output slice -> no extra HBM passes).
    x3 = x.reshape(N, C, HW)
    w3 = weight.reshape(1, C, 1)
    blk = HW if S >= R else S * 128   # multiple of 128, or the full extent
    out = pl.pallas_call(
        _l2norm_kernel,
        out_shape=jax.ShapeDtypeStruct((N, C, HW), x.dtype),
        grid_spec=pltpu.PrefetchScalarGridSpec(
            num_scalar_prefetch=0,
            grid=(N, pl.cdiv(HW, blk)),
            in_specs=[
                pl.BlockSpec((1, C, 1), lambda n, s: (0, 0, 0)),
                pl.BlockSpec((1, C, blk), lambda n, s: (n, 0, s)),
            ],
            out_specs=pl.BlockSpec((1, C, blk), lambda n, s: (n, 0, s)),
        ),
        compiler_params=cparams,
    )(w3, x3)
    return out.reshape(N, C, H, W)


if __name__ == "__main__":
    key = jax.random.PRNGKey(0)
    N, C, H, W = 2, 4, 16, 16
    scale = 2.0

    x = jax.random.normal(key, (N, C, H, W), dtype=jnp.float32)
    # deterministic parameter init matching the torch __init__: weight = scale
    weight = jnp.full((C,), scale, dtype=jnp.float32)

    y = jax.block_until_ready(l2norm(x, weight))

    # pure-JAX reference (torch formula: sqrt(sum) + eps, then divide)
    norm = jnp.sqrt(jnp.sum(x * x, axis=1, keepdims=True)) + _EPS
    y_ref = x / norm * weight.reshape(1, -1, 1, 1)
    assert y.shape == (N, C, H, W)
    assert jnp.allclose(y, y_ref, atol=1e-6, rtol=1e-5), float(
        jnp.max(jnp.abs(y - y_ref)))

    # Also exercise the ragged (HW % 128 != 0) path once: no pad/slice copies.
    x2 = jax.random.normal(jax.random.PRNGKey(1), (1, C, 10, 10), jnp.float32)
    y2 = jax.block_until_ready(l2norm(x2, weight))
    norm2 = jnp.sqrt(jnp.sum(x2 * x2, axis=1, keepdims=True)) + _EPS
    y2_ref = x2 / norm2 * weight.reshape(1, -1, 1, 1)
    assert jnp.allclose(y2, y2_ref, atol=1e-6, rtol=1e-5), float(
        jnp.max(jnp.abs(y2 - y2_ref)))

    print("KERNEL_OK")
</pallas_src>

<mosaic_0001>
module attributes {stable_mosaic.version = 11 : i64} {
  func.func @_l2norm_kernel(%arg0: i32, %arg1: i32, %arg2: memref<1x4x1x128xf32, #tpu.memory_space<vmem>>, %arg3: memref<1x4x2x128xf32, #tpu.memory_space<vmem>>, %arg4: memref<1x4x2x128xf32, #tpu.memory_space<vmem>>) attributes {dimension_semantics = [#tpu.dimension_semantics<parallel>, #tpu.dimension_semantics<parallel>], iteration_bounds = array<i64: 2, 1>, scalar_prefetch = 0 : i64, scratch_operands = 0 : i64, tpu.core_type = #tpu.core_type<tc>, window_params = [{pipeline_mode = #tpu.pipeline_mode<synchronous>, transform_indices = @transform_0, window_bounds = array<i64: 1, 4, 1, 128>}, {transform_indices = @transform_1, window_bounds = array<i64: 1, 4, 2, 128>}, {transform_indices = @transform_2, window_bounds = array<i64: 1, 4, 2, 128>}]} {
    %c0 = arith.constant 0 : index
    %c0_0 = arith.constant 0 : index
    %c0_1 = arith.constant 0 : index
    %c0_2 = arith.constant 0 : index
    %0 = vector.load %arg3[%c0, %c0_0, %c0_1, %c0_2] : memref<1x4x2x128xf32, #tpu.memory_space<vmem>>, vector<1x4x2x128xf32>
    %1 = arith.mulf %0, %0 : vector<1x4x2x128xf32>
    %cst = arith.constant dense<0.000000e+00> : vector<1x2x128xf32>
    %2 = vector.multi_reduction <add>, %1, %cst [1] : vector<1x4x2x128xf32> to vector<1x2x128xf32>
    %3 = vector.shape_cast %2 : vector<1x2x128xf32> to vector<1x1x2x128xf32>
    %cst_3 = arith.constant 9.99999968E-21 : f32
    %4 = vector.broadcast %cst_3 : f32 to vector<1x1x2x128xf32>
    %5 = arith.addf %3, %4 : vector<1x1x2x128xf32>
    %6 = math.rsqrt %5 : vector<1x1x2x128xf32>
    %7 = vector.broadcast %6 : vector<1x1x2x128xf32> to vector<1x4x2x128xf32>
    %8 = arith.mulf %0, %7 : vector<1x4x2x128xf32>
    %c0_4 = arith.constant 0 : index
    %c0_5 = arith.constant 0 : index
    %c0_6 = arith.constant 0 : index
    %c0_7 = arith.constant 0 : index
    %9 = vector.load %arg2[%c0_4, %c0_5, %c0_6, %c0_7] : memref<1x4x1x128xf32, #tpu.memory_space<vmem>>, vector<1x4x1x128xf32>
    %10 = vector.broadcast %9 : vector<1x4x1x128xf32> to vector<1x4x2x128xf32>
    %11 = arith.mulf %8, %10 : vector<1x4x2x128xf32>
    %c0_8 = arith.constant 0 : index
    %c0_9 = arith.constant 0 : index
    %c0_10 = arith.constant 0 : index
    %c0_11 = arith.constant 0 : index
    %12 = vector.load %arg4[%c0_8, %c0_9, %c0_10, %c0_11] : memref<1x4x2x128xf32, #tpu.memory_space<vmem>>, vector<1x4x2x128xf32>
    tpu.vector_store %arg4[%c0_8, %c0_9, %c0_10, %c0_11], %11 {strides = array<i32>} : memref<1x4x2x128xf32, #tpu.memory_space<vmem>>, vector<1x4x2x128xf32>,
    return
  }
  func.func @transform_0(%arg0: i32, %arg1: i32) -> (i32, i32, i32, i32) {
    %c0_i32 = arith.constant 0 : i32
    %c0_i32_0 = arith.constant 0 : i32
    %c0_i32_1 = arith.constant 0 : i32
    %c0_i32_2 = arith.constant 0 : i32
    %c0_i32_3 = arith.constant 0 : i32
    return %c0_i32, %c0_i32_0, %c0_i32_1, %c0_i32_2 : i32, i32, i32, i32
  }
  func.func @transform_1(%arg0: i32, %arg1: i32) -> (i32, i32, i32, i32) {
    %c0_i32 = arith.constant 0 : i32
    %c0_i32_0 = arith.constant 0 : i32
    %c0_i32_1 = arith.constant 0 : i32
    return %arg0, %c0_i32, %arg1, %c0_i32_0 : i32, i32, i32, i32
  }
  func.func @transform_2(%arg0: i32, %arg1: i32) -> (i32, i32, i32, i32) {
    %c0_i32 = arith.constant 0 : i32
    %c0_i32_0 = arith.constant 0 : i32
    %c0_i32_1 = arith.constant 0 : i32
    return %arg0, %c0_i32, %arg1, %c0_i32_0 : i32, i32, i32, i32
  }
}

</mosaic_0001>

<llo_original>
// kernel: tpu_custom_call.1
$region0: #{tpu_custom_call.1}
  #allocation0 [shape = 'u32[]', space=smem, size = 0x4, offset = 0x4, fixed_abs, tag = 'smem constant byte address 0x4 - core index']
  #allocation1 [shape = 'u32[144,128]{1,0:T(1,128)}', space=vmem, size = 0x12000, scoped, tag = 'internal scratch']
  %s0 = inlined_call_operand.hbm [shape: f32[1,4,1,128], index: 0, kind: input, shape index: {}]
  %s1 = inlined_call_operand.hbm [shape: f32[2,4,2,128], index: 1, kind: input, shape index: {}]
  %s2 = inlined_call_operand.hbm [shape: f32[2,4,2,128], index: 2, kind: output, shape index: {}]
  %s3 = sld [smem:[#allocation0]]
  $region49: #{tpu_custom_call.1} parent=0
    _
  %s5 = ssub.s32 1, %s3
  %s6 = scalar_select 0, %s5, %s3
  $region1: #{tpu_custom_call.1} parent=0
    #allocation2 [shape = 'u8[2048]{0}', space=vmem, size = 0x800, scoped, tag = 'input window, operand 0, single buffered']
    #allocation3 [shape = 's32[2]{0}', space=sflag, size = 0x8, scoped, tag = 'scoped memory for tpu_custom_call.1']
    #allocation4 [shape = 's32[2]{0}', space=sflag, size = 0x8, scoped, tag = 'scoped memory for tpu_custom_call.1']
    #allocation5 [shape = 'u8[8192]{0}', space=vmem, size = 0x2000, scoped, tag = 'input window, operand 1']
    #allocation6 [shape = 's32[2]{0}', space=sflag, size = 0x8, scoped, tag = 'scoped memory for tpu_custom_call.1']
    #allocation7 [shape = 'u8[8192]{0}', space=vmem, size = 0x2000, scoped, tag = 'output window, operand 0']
    %7 = vsyncpa [#allocation3], 0
    %8 = vsyncpa [#allocation6], 0
    %s9 = scalar_lea.sflag [#allocation6], 1
    %10 = vsyncpa %s9, 0
    %11 = vsyncpa [#allocation4], 0
    %s12 = scalar_lea.sflag [#allocation4], 1
    %13 = vsyncpa %s12, 0
    loop: start=0, step=1, limit=4
    $region2: #{tpu_custom_call.1} parent=1 // loop_pre_header
      _
    $region3: #{tpu_custom_call.1} parent=1 // loop_header
      %s15 = sphi 0, %s19
      %p16 = scmp.ge.s32.totalorder %s15, 4
      %s22 = sphi 0, %s34
      %s23 = sphi 0, %s30
      %s24 = sphi 0, %s22
      %s25 = sphi 0, %s23
      %s26 = sphi 0, %s24
      %s27 = sphi 0, %s25
      %s35 = sphi 0, %s35
      %s37 = sphi 0, %s35
      %s38 = sphi 0, %s37
      %s52 = sphi 0, %s38
      %s60 = sphi 0, %s62
      %s63 = sphi 0, %s60
      %s64 = sphi 0, %s63
      %s80 = sphi 0, %s64
      %s88 = sphi 0, %s90
      %s91 = sphi 0, %s88
      %s92 = sphi 0, %s91
      %s108 = sphi 0, %s92
    $region4: #{tpu_custom_call.1} parent=1 // loop_header_branch
      %18 = sbr.rel (%p16) target = $region8
    $region5: #{tpu_custom_call.1} parent=1 // loop_body
      %s20 = ssub.s32 %s15, 1
      %s21 = ssub.s32 %s15, 2
      %s28 = sadd.s32 1, %s23
      %p29 = scmp.ge.s32.totalorder %s28, 1
      %s30 = scalar_select %p29, 0, %s28
      %s31 = sadd.s32 1, %s22
      %s32 = scalar_select %p29, %s31, %s22
      %p33 = scmp.ge.s32.totalorder %s32, 2
      %s34 = scalar_select %p33, 0, %s32
      %s36 = sadd.s32 %s35, 1
      %p39 = scmp.eq.s32.totalorder %s15, 1
      %p40 = scmp.ne.s32.totalorder %s35, %s37
      %p41 = scmp.eq.s32.totalorder %s15, 0
      %p42 = por %p40, %p41
      %p43 = scmp.ne.s32.totalorder %s35, %s37
      %p44 = scmp.eq.s32.totalorder %s20, 1
      %p45 = por %p43, %p44
      %p46 = scmp.ne.s32.totalorder %s37, %s38
      %p47 = scmp.eq.s32.totalorder %s20, 0
      %p48 = por %p46, %p47
      %p49 = scmp.ne.s32.totalorder %s37, %s38
      %p50 = scmp.eq.s32.totalorder %s21, 1
      %p51 = por %p49, %p50
      %p53 = scmp.ne.s32.totalorder %s38, %s52
      %p54 = scmp.eq.s32.totalorder %s21, 0
      %p55 = por %p53, %p54
      %s56 = ssub.s32 %s22, %s34
      %s57 = ssub.s32 %s23, %s30
      %s58 = sor.u32 %s56, %s57
      %p59 = scmp.eq.s32.totalorder %s58, 0
      %s61 = sadd.s32 %s60, 1
      %s62 = scalar_select %p59, %s60, %s61
      %p65 = pneg %p59
      %p66 = scmp.eq.s32.totalorder %s15, 1
      %p67 = por %p65, %p66
      %p68 = scmp.ne.s32.totalorder %s60, %s63
      %p69 = scmp.eq.s32.totalorder %s15, 0
      %p70 = por %p68, %p69
      %p71 = scmp.ne.s32.totalorder %s60, %s63
      %p72 = scmp.eq.s32.totalorder %s20, 1
      %p73 = por %p71, %p72
      %p74 = scmp.ne.s32.totalorder %s63, %s64
      %p75 = scmp.eq.s32.totalorder %s20, 0
      %p76 = por %p74, %p75
      %p77 = scmp.ne.s32.totalorder %s63, %s64
      %p78 = scmp.eq.s32.totalorder %s21, 1
      %p79 = por %p77, %p78
      %p81 = scmp.ne.s32.totalorder %s64, %s80
      %p82 = scmp.eq.s32.totalorder %s21, 0
      %p83 = por %p81, %p82
      %s84 = ssub.s32 %s22, %s34
      %s85 = ssub.s32 %s23, %s30
      %s86 = sor.u32 %s84, %s85
      %p87 = scmp.eq.s32.totalorder %s86, 0
      %s89 = sadd.s32 %s88, 1
      %s90 = scalar_select %p87, %s88, %s89
      %p93 = pneg %p87
      %p94 = scmp.eq.s32.totalorder %s15, 1
      %p95 = por %p93, %p94
      %p96 = scmp.ne.s32.totalorder %s88, %s91
      %p97 = scmp.eq.s32.totalorder %s15, 0
      %p98 = por %p96, %p97
      %p99 = scmp.ne.s32.totalorder %s88, %s91
      %p100 = scmp.eq.s32.totalorder %s20, 1
      %p101 = por %p99, %p100
      %p102 = scmp.ne.s32.totalorder %s91, %s92
      %p103 = scmp.eq.s32.totalorder %s20, 0
      %p104 = por %p102, %p103
      %p105 = scmp.ne.s32.totalorder %s91, %s92
      %p106 = scmp.eq.s32.totalorder %s21, 1
      %p107 = por %p105, %p106
      %p109 = scmp.ne.s32.totalorder %s92, %s108
      %p110 = scmp.eq.s32.totalorder %s21, 0
      %p111 = por %p109, %p110
      %p112 = scmp.le.s32.totalorder 1, %s15
      %p113 = scmp.lt.s32.totalorder %s15, 3
      %p114 = pnand %p112, %p113
      %p115 = pneg %p114
      // Predicated region
      $region9: #{tpu_custom_call.1} parent=5 // pred_check
        _
      $region10: #{tpu_custom_call.1} parent=5 // pred_check_branch
        %117 = sbr.rel (%p114) target = $region12
      $region11: #{tpu_custom_call.1} parent=5 // pred_region
        %s118 = ssub.s32 %s15, 1
        // Predicated region
        $region13: #{tpu_custom_call.1} parent=11 // pred_check
          %p119 = pneg %p48
        $region14: #{tpu_custom_call.1} parent=11 // pred_check_branch
          %121 = sbr.rel (%p119) target = $region16
        $region15: #{tpu_custom_call.1} parent=11 // pred_region
          %s123 = ssub.s32 64, 64
          %124 = vsyncadd [#allocation3], %s123
          %s125 = sshll.u32 [#allocation2], 4
          %s126 = int_to_ptr.vmem [resolvable:$true] %s125
          %131 = dma.hbm_to_vmem [thread:$0]  %s0, 64, %s126, [#allocation3], 16, 16, 1
        $region16: #{tpu_custom_call.1} parent=11 // pred_fallthru
          _
      $region12: #{tpu_custom_call.1} parent=5 // pred_fallthru
        _
      %p132 = scmp.lt.s32.totalorder %s15, 2
      // Predicated region
      $region17: #{tpu_custom_call.1} parent=5 // pred_check
        %p133 = pneg %p132
      $region18: #{tpu_custom_call.1} parent=5 // pred_check_branch
        %135 = sbr.rel (%p133) target = $region20
      $region19: #{tpu_custom_call.1} parent=5 // pred_region
        // Predicated region
        $region21: #{tpu_custom_call.1} parent=19 // pred_check
          %p136 = pneg %p70
        $region22: #{tpu_custom_call.1} parent=19 // pred_check_branch
          %138 = sbr.rel (%p136) target = $region24
        $region23: #{tpu_custom_call.1} parent=19 // pred_region
          %s139 = sand.u32 %s60, 1
          %s140 = scalar_lea.sflag [#allocation6], %s139
          %s141 = sand.u32 %s60, 1
          %s142 = smul.addr %s141, 8
          %s143 = scalar_lea.vmem [#allocation5], %s142
          %s145 = ssub.s32 128, 128
          %146 = vsyncadd %s140, %s145
          %s147 = smul.addr %s22, 4
          %s148 = sadd.s32 %s23, %s147
          %s149 = smul.addr %s148, 32
          %s150 = scalar_lea.hbm %s1, %s149
          %s151 = sshll.u32 %s143, 4
          %s152 = int_to_ptr.vmem [resolvable:$true] %s151
          %157 = dma.hbm_to_vmem [thread:$0]  %s150, 128, %s152, %s140, 32, 32, 2
        $region24: #{tpu_custom_call.1} parent=19 // pred_fallthru
          _
      $region20: #{tpu_custom_call.1} parent=5 // pred_fallthru
        _
      %p158 = scmp.le.s32.totalorder 1, %s15
      %p159 = scmp.lt.s32.totalorder %s15, 3
      %p160 = pnand %p158, %p159
      %p161 = pneg %p160
      // Predicated region
      $region25: #{tpu_custom_call.1} parent=5 // pred_check
        _
      $region26: #{tpu_custom_call.1} parent=5 // pred_check_branch
        %163 = sbr.rel (%p160) target = $region28
      $region27: #{tpu_custom_call.1} parent=5 // pred_region
        %s164 = ssub.s32 %s15, 1
        // Predicated region
        $region29: #{tpu_custom_call.1} parent=27 // pred_check
          %p165 = pneg %p48
        $region30: #{tpu_custom_call.1} parent=27 // pred_check_branch
          %167 = sbr.rel (%p165) target = $region32
        $region31: #{tpu_custom_call.1} parent=27 // pred_region
          %168 = dma.done [#allocation3], 64
        $region32: #{tpu_custom_call.1} parent=27 // pred_fallthru
          _
        %s169 = sand.u32 %s63, 1
        %s170 = scalar_lea.sflag [#allocation6], %s169
        %s171 = sand.u32 %s63, 1
        %s172 = smul.addr %s171, 8
        %s173 = scalar_lea.vmem [#allocation5], %s172
        // Predicated region
        $region33: #{tpu_custom_call.1} parent=27 // pred_check
          %p174 = pneg %p76
        $region34: #{tpu_custom_call.1} parent=27 // pred_check_branch
          %176 = sbr.rel (%p174) target = $region36
        $region35: #{tpu_custom_call.1} parent=27 // pred_region
          %177 = dma.done %s170, 128
        $region36: #{tpu_custom_call.1} parent=27 // pred_fallthru
          _
        %p178 = pneg %p48
        %p179 = pneg %p45
        %s180 = sand.u32 %s63, 1
        %s181 = scalar_lea.sflag [#allocation6], %s180
        %s182 = sand.u32 %s63, 1
        %s183 = smul.addr %s182, 8
        %s184 = scalar_lea.vmem [#allocation5], %s183
        %p185 = pneg %p76
        %p186 = pneg %p73
        %p187 = pneg %p104
        %p188 = pneg %p101
        %s189 = sand.u32 %s91, 1
        %s190 = scalar_lea.sflag [#allocation4], %s189
        %s191 = sand.u32 %s91, 1
        %s192 = smul.addr %s191, 8
        %s193 = scalar_lea.vmem [#allocation7], %s192
        %v194 = vld [vmem:[%s173] sm:$0x3]
        %v195 = vld [vmem:[%s173 + $0x2] sm:$0x3]
        %v196 = vld [vmem:[%s173 + $0x4] sm:$0x3]
        %v197 = vld [vmem:[%s173 + $0x6] sm:$0x3]
        %v198 = vmul.f32 %v194, %v194
        %v199 = vmul.f32 %v195, %v195
        %v200 = vmul.f32 %v196, %v196
        %v201 = vmul.f32 %v197, %v197
        %vm202 = vcmask 1041408
        %v203 = vsel %vm202, %v198, 0.0
        %v204 = vsel %vm202, %v199, 0.0
        %v205 = vadd.f32 %v203, %v204
        %v206 = vsel %vm202, %v200, 0.0
        %v207 = vadd.f32 %v205, %v206
        %v208 = vsel %vm202, %v201, 0.0
        %v209 = vadd.f32 %v207, %v208
        %v210 = vadd.f32 %v209, 1e-20
        %v211 = vrsqrt.pop %v210
        %v212 = vmul.f32 %v194, %v211
        %v213 = vmul.f32 %v195, %v211
        %v214 = vmul.f32 %v196, %v211
        %v215 = vmul.f32 %v197, %v211
        %v216 = vld [vmem:[#allocation2] sm:$0x1]
        %v217 = vld [vmem:[#allocation2 + $0x1] sm:$0x1]
        %v218 = vld [vmem:[#allocation2 + $0x2] sm:$0x1]
        %v219 = vld [vmem:[#allocation2 + $0x3] sm:$0x1]
        %v224 = vlaneseq
        %v225 = vshrl.u32 %v224, 7
        %v226 = vsub.s32 0, %v225
        %v227 = vrot.slane %v216, %v226
        %v228 = vlaneseq
        %v229 = vshrl.u32 %v228, 7
        %v230 = vsub.s32 0, %v229
        %v231 = vrot.slane %v217, %v230
        %v232 = vlaneseq
        %v233 = vshrl.u32 %v232, 7
        %v234 = vsub.s32 0, %v233
        %v235 = vrot.slane %v218, %v234
        %v236 = vlaneseq
        %v237 = vshrl.u32 %v236, 7
        %v238 = vsub.s32 0, %v237
        %v239 = vrot.slane %v219, %v238
        %v244 = vmul.f32 %v212, %v227
        %v245 = vmul.f32 %v213, %v231
        %v246 = vmul.f32 %v214, %v235
        %v247 = vmul.f32 %v215, %v239
        %248 = vst [vmem:[%s193] sm:$0x3] %v244
        %249 = vst [vmem:[%s193 + $0x2] sm:$0x3] %v245
        %250 = vst [vmem:[%s193 + $0x4] sm:$0x3] %v246
        %251 = vst [vmem:[%s193 + $0x6] sm:$0x3] %v247
        %s252 = sand.u32 %s91, 1
        %s253 = scalar_lea.sflag [#allocation4], %s252
        %s254 = sand.u32 %s91, 1
        %s255 = smul.addr %s254, 8
        %s256 = scalar_lea.vmem [#allocation7], %s255
        // Predicated region
        $region37: #{tpu_custom_call.1} parent=27 // pred_check
          %p257 = pneg %p101
        $region38: #{tpu_custom_call.1} parent=27 // pred_check_branch
          %259 = sbr.rel (%p257) target = $region40
        $region39: #{tpu_custom_call.1} parent=27 // pred_region
          %s261 = ssub.s32 128, 128
          %262 = vsyncadd %s253, %s261
          %s263 = smul.addr %s24, 4
          %s264 = sadd.s32 %s25, %s263
          %s265 = smul.addr %s264, 32
          %s266 = scalar_lea.hbm %s2, %s265
          %s267 = sshll.u32 %s256, 4
          %s268 = int_to_ptr.vmem [resolvable:$true] %s267
          %273 = dma.vmem_to_hbm [thread:$0]  %s268, 128, %s266, %s253, 32, 32, 2
        $region40: #{tpu_custom_call.1} parent=27 // pred_fallthru
          _
      $region28: #{tpu_custom_call.1} parent=5 // pred_fallthru
        _
      %p274 = scmp.le.s32.totalorder 2, %s15
      // Predicated region
      $region41: #{tpu_custom_call.1} parent=5 // pred_check
        %p275 = pneg %p274
      $region42: #{tpu_custom_call.1} parent=5 // pred_check_branch
        %277 = sbr.rel (%p275) target = $region44
      $region43: #{tpu_custom_call.1} parent=5 // pred_region
        %s278 = ssub.s32 %s15, 2
        // Predicated region
        $region45: #{tpu_custom_call.1} parent=43 // pred_check
          %p279 = pneg %p107
        $region46: #{tpu_custom_call.1} parent=43 // pred_check_branch
          %281 = sbr.rel (%p279) target = $region48
        $region47: #{tpu_custom_call.1} parent=43 // pred_region
          %s282 = sand.u32 %s92, 1
          %s283 = scalar_lea.sflag [#allocation4], %s282
          %s284 = sand.u32 %s92, 1
          %s285 = smul.addr %s284, 8
          %s286 = scalar_lea.vmem [#allocation7], %s285
          %287 = dma.done %s283, 128
        $region48: #{tpu_custom_call.1} parent=43 // pred_fallthru
          _
      $region44: #{tpu_custom_call.1} parent=5 // pred_fallthru
        _
    $region6: #{tpu_custom_call.1} parent=1 // loop_footer
      %s19 = sadd.s32 1, %s15
    $region7: #{tpu_custom_call.1} parent=1 // loop_footer_branch
      %14 = sbr.rel target = $region3
    $region8: #{tpu_custom_call.1} parent=1 // loop_exit
      _
    %288 = vsyncpa [#allocation3], 1
    %s289 = scalar_lea.sflag [#allocation3], 1
    %290 = vsyncpa %s289, 1
    %291 = vsyncpa [#allocation6], 1
    %s292 = scalar_lea.sflag [#allocation6], 1
    %293 = vsyncpa %s292, 1
    %294 = vsyncpa [#allocation4], 1
    %s295 = scalar_lea.sflag [#allocation4], 1
    %296 = vsyncpa %s295, 1

</llo_original>
